<compile_context>
chip_gen: v7x
topology: tpu7x:2x2x1
jax: 0.10.0
libtpu: 0.0.40
codegen_flags: <defaults>
</compile_context>

<pallas_src>
import functools

import jax
import jax.numpy as jnp
from jax.experimental import pallas as pl
from jax.experimental.pallas import tpu as pltpu


def _round_up(x, m):
    return (x + m - 1) // m * m


def _vmem_limit_bytes():
    """Generation-aware scoped-VMEM budget.

    ~3/4 of physical VMEM per TensorCore (v5e/v6e: 128 MiB -> 96 MiB,
    v7x: 64 MiB -> 48 MiB), with a conservative 40 MiB fallback that fits
    every listed generation.
    """
    try:
        info = pltpu.get_tpu_info()
        phys = int(getattr(info, "vmem_capacity_bytes", 0))
        if phys > 0:
            return min(phys * 3 // 4, 96 << 20)
    except Exception:
        pass
    return 40 << 20


def _resident_spec(shape):
    """Constant-index (VMEM-resident) BlockSpec; single-buffered if supported."""
    index_map = lambda i, j: (0,) * len(shape)
    try:
        return pl.BlockSpec(shape, index_map, pipeline_mode=pl.Buffered(1))
    except TypeError:  # BlockSpec without pipeline_mode kwarg
        return pl.BlockSpec(shape, index_map)


def _effnet_proj_kernel(x_ref, w_ref, b_ref, out_ref, acc_ref, *, hw_rem):
    # x_ref: (TILE_N, C, TILE_HW) f32 NCHW tile straight from HBM (no wrapper
    # relayout). Pool over the spatial (lane) axis, accumulating in f32 without
    # ever materializing a cast copy of the tile. The 1/HW mean scale is folded
    # into w_ref, so this is a sum, not a mean.
    j = pl.program_id(1)
    nj = pl.num_programs(1)

    @pl.when(j == 0)
    def _():
        acc_ref[...] = jnp.zeros_like(acc_ref)

    x = x_ref[...]                                            # (TILE_N, C, TILE_HW) f32
    if hw_rem:  # static: spatial axis was split and its last tile is ragged
        lane = jax.lax.broadcasted_iota(jnp.int32, x.shape, dimension=2)
        limit = jnp.where(j == nj - 1, hw_rem, x.shape[2])
        x = jnp.where(lane < limit, x, 0.0)
    acc_ref[...] += jnp.sum(x, axis=-1)                       # (TILE_N, C) f32

    @pl.when(j == nj - 1)
    def _():
        # Fused (backbone head + projection) affine map on the MXU:
        # bf16 operands, f32 accumulation, f32 bias added in f32.
        out = jnp.dot(acc_ref[...].astype(jnp.bfloat16), w_ref[...],
                      preferred_element_type=jnp.float32) + b_ref[...]
        out_ref[...] = out                                    # (TILE_N, OUT) f32


def efficientnet_with_projection(x_nchw, w_feat, b_feat, w_proj, b_proj):
    """x_nchw: (N, C, H, W) float32.  Returns (N, output_dim) float32."""
    n, c, h, w = x_nchw.shape
    hw = h * w
    out_dim = w_proj.shape[1]

    # ---- fuse the two affine layers (+ mean scale) once, in f32 -------------
    # Valid because there is no nonlinearity between the stand-in head Linear
    # and the projection Linear; 1/HW folded in so the kernel pools with a sum.
    w_comb = ((w_feat @ w_proj) * (1.0 / hw)).astype(jnp.bfloat16)   # (C, OUT)
    b_comb = (b_feat @ w_proj + b_proj).reshape(1, -1).astype(jnp.float32)

    # Contiguous-dims collapse only: pure metadata, no extra HBM pass over x.
    x3 = x_nchw.reshape(n, c, hw)

    # ---- generation-aware tile sizing (VMEM-layout bytes) --------------------
    lane = lambda d: _round_up(d, 128)
    sub = lambda d: _round_up(d, 8)

    vmem_limit = _vmem_limit_bytes()
    w_vmem = sub(c) * lane(out_dim) * 2           # bf16 fused weight, single-buffered
    b_vmem = 8 * lane(out_dim) * 4                # f32 bias
    slack = 2 << 20                               # compiler internal scratch
    avail = vmem_limit - w_vmem - b_vmem - slack

    x_row = c * lane(hw) * 4                      # one batch row of x in VMEM (f32)
    out_row = lane(out_dim) * 4                   # one output row (f32)
    acc_row = lane(c) * 4                         # one accumulator row (f32)
    per_row_full_hw = 2 * x_row + 2 * out_row + acc_row   # x/out double-buffered

    min_rows = min(8, n)
    if min_rows * per_row_full_hw <= avail:
        # Common case: the whole spatial extent fits in one tile per batch row.
        tile_hw = hw
        tile_n = min(avail // per_row_full_hw, 256, n)
        if tile_n < n:
            tile_n = max(min_rows, tile_n // 8 * 8)
        # Keep >= 2 grid steps along the parallel batch axis when the batch
        # allows it (v7x has 2 TensorCores; also enables DMA/compute overlap).
        if tile_n >= n and n > 8:
            tile_n = max(8, _round_up(pl.cdiv(n, 2), 8))
    else:
        # Large feature map: split HW as an inner reduction grid axis.
        tile_n = min_rows
        fixed = tile_n * (2 * out_row + acc_row)
        x_budget = avail - fixed
        tile_hw = (x_budget // (2 * tile_n * c * 4)) // 128 * 128
        if tile_hw < 128:
            raise ValueError(
                "feature map too large for the VMEM budget; reduce channels / "
                "spatial size or raise vmem_limit_bytes")
        tile_hw = min(tile_hw, hw)

    grid_n = pl.cdiv(n, tile_n)
    grid_hw = pl.cdiv(hw, tile_hw)
    hw_rem = hw % tile_hw                         # 0 unless the HW axis is split raggedly

    kernel = functools.partial(_effnet_proj_kernel, hw_rem=hw_rem)

    out = pl.pallas_call(
        kernel,
        out_shape=jax.ShapeDtypeStruct((n, out_dim), jnp.float32),
        grid_spec=pltpu.PrefetchScalarGridSpec(
            num_scalar_prefetch=0,
            grid=(grid_n, grid_hw),
            in_specs=[
                # x: one (batch, spatial) tile per grid step, double-buffered.
                pl.BlockSpec((tile_n, c, tile_hw), lambda i, j: (i, 0, j)),
                # fused weights + bias: constant index_map -> resident in VMEM.
                _resident_spec((c, out_dim)),
                _resident_spec((1, out_dim)),
            ],
            out_specs=pl.BlockSpec((tile_n, out_dim), lambda i, j: (i, 0)),
            scratch_shapes=[pltpu.VMEM((tile_n, c), jnp.float32)],
        ),
        compiler_params=pltpu.CompilerParams(
            dimension_semantics=("parallel", "arbitrary"),
            vmem_limit_bytes=vmem_limit,
        ),
        cost_estimate=pl.CostEstimate(
            flops=2 * n * c * out_dim + n * c * hw,
            transcendentals=0,
            bytes_accessed=(x3.size * 4 + w_comb.size * 2
                            + b_comb.size * 4 + n * out_dim * 4),
        ),
    )(x3, w_comb, b_comb)

    return out


def init_params(key, in_channels, feat_dim=1280, output_dim=1024):
    """Deterministic PyTorch-style (uniform +/- 1/sqrt(fan_in)) init."""
    k1, k2, k3, k4 = jax.random.split(key, 4)
    bound_f = 1.0 / jnp.sqrt(in_channels)
    bound_p = 1.0 / jnp.sqrt(feat_dim)
    w_feat = jax.random.uniform(k1, (in_channels, feat_dim), jnp.float32,
                                -bound_f, bound_f)
    b_feat = jax.random.uniform(k2, (feat_dim,), jnp.float32, -bound_f, bound_f)
    w_proj = jax.random.uniform(k3, (feat_dim, output_dim), jnp.float32,
                                -bound_p, bound_p)
    b_proj = jax.random.uniform(k4, (output_dim,), jnp.float32, -bound_p, bound_p)
    return w_feat, b_feat, w_proj, b_proj


if __name__ == "__main__":
    key = jax.random.PRNGKey(0)
    k_x, k_p = jax.random.split(key)

    N, C, H, W = 2, 4, 16, 16
    x = jax.random.normal(k_x, (N, C, H, W), dtype=jnp.float32)
    w_feat, b_feat, w_proj, b_proj = init_params(k_p, C)

    out = efficientnet_with_projection(x, w_feat, b_feat, w_proj, b_proj)
    out = jax.block_until_ready(out)

    # sanity: pure-JAX f32 reference of the same (un-fused) computation
    pooled = x.reshape(N, C, H * W).mean(axis=-1)
    ref = (pooled @ w_feat + b_feat) @ w_proj + b_proj
    assert out.shape == (N, 1024)
    # bf16 fused weights / MXU operands with f32 accumulation -> loosened tol
    assert jnp.allclose(out, ref, atol=1e-2, rtol=1e-2), (
        float(jnp.max(jnp.abs(out - ref))))

    print("KERNEL_OK")
</pallas_src>

<mosaic_0001>
module attributes {stable_mosaic.version = 11 : i64} {
  func.func @_effnet_proj_kernel(%arg0: i32, %arg1: i32, %arg2: memref<2x4x256xf32, #tpu.memory_space<vmem>>, %arg3: memref<4x1024xbf16, #tpu.memory_space<vmem>>, %arg4: memref<1x1024xf32, #tpu.memory_space<vmem>>, %arg5: memref<2x1024xf32, #tpu.memory_space<vmem>>, %arg6: memref<2x4xf32, #tpu.memory_space<vmem>>) attributes {dimension_semantics = [#tpu.dimension_semantics<parallel>, #tpu.dimension_semantics<arbitrary>], iteration_bounds = array<i64: 1, 1>, scalar_prefetch = 0 : i64, scratch_operands = 1 : i64, tpu.core_type = #tpu.core_type<tc>, window_params = [{transform_indices = @transform_0, window_bounds = array<i64: 2, 4, 256>}, {pipeline_mode = #tpu.pipeline_mode<synchronous>, transform_indices = @transform_1, window_bounds = array<i64: 4, 1024>}, {pipeline_mode = #tpu.pipeline_mode<synchronous>, transform_indices = @transform_2, window_bounds = array<i64: 1, 1024>}, {transform_indices = @transform_3, window_bounds = array<i64: 2, 1024>}]} {
    %c0_i32 = arith.constant 0 : i32
    %0 = arith.cmpi eq, %arg1, %c0_i32 : i32
    %1 = arith.extui %0 : i1 to i32
    %c0_i32_0 = arith.constant 0 : i32
    %2 = arith.cmpi ne, %1, %c0_i32_0 : i32
    scf.if %2 {
      %cst_9 = arith.constant 0.000000e+00 : f32
      %11 = vector.broadcast %cst_9 : f32 to vector<2x4xf32>
      %c0_10 = arith.constant 0 : index
      %c0_11 = arith.constant 0 : index
      %12 = vector.load %arg6[%c0_10, %c0_11] : memref<2x4xf32, #tpu.memory_space<vmem>>, vector<2x4xf32>
      tpu.vector_store %arg6[%c0_10, %c0_11], %11 {strides = array<i32>} : memref<2x4xf32, #tpu.memory_space<vmem>>, vector<2x4xf32>,
    } else {
    }
    %c0 = arith.constant 0 : index
    %c0_1 = arith.constant 0 : index
    %c0_2 = arith.constant 0 : index
    %3 = vector.load %arg2[%c0, %c0_1, %c0_2] : memref<2x4x256xf32, #tpu.memory_space<vmem>>, vector<2x4x256xf32>
    %c0_3 = arith.constant 0 : index
    %c0_4 = arith.constant 0 : index
    %4 = vector.load %arg6[%c0_3, %c0_4] : memref<2x4xf32, #tpu.memory_space<vmem>>, vector<2x4xf32>
    %cst = arith.constant dense<0.000000e+00> : vector<2x4xf32>
    %5 = vector.multi_reduction <add>, %3, %cst [2] : vector<2x4x256xf32> to vector<2x4xf32>
    %6 = arith.addf %4, %5 : vector<2x4xf32>
    %c0_5 = arith.constant 0 : index
    %c0_6 = arith.constant 0 : index
    %7 = vector.load %arg6[%c0_5, %c0_6] : memref<2x4xf32, #tpu.memory_space<vmem>>, vector<2x4xf32>
    tpu.vector_store %arg6[%c0_5, %c0_6], %6 {strides = array<i32>} : memref<2x4xf32, #tpu.memory_space<vmem>>, vector<2x4xf32>,
    %c0_i32_7 = arith.constant 0 : i32
    %8 = arith.cmpi eq, %arg1, %c0_i32_7 : i32
    %9 = arith.extui %8 : i1 to i32
    %c0_i32_8 = arith.constant 0 : i32
    %10 = arith.cmpi ne, %9, %c0_i32_8 : i32
    scf.if %10 {
      %c0_9 = arith.constant 0 : index
      %c0_10 = arith.constant 0 : index
      %11 = vector.load %arg6[%c0_9, %c0_10] : memref<2x4xf32, #tpu.memory_space<vmem>>, vector<2x4xf32>
      %12 = arith.truncf %11 : vector<2x4xf32> to vector<2x4xbf16>
      %c0_11 = arith.constant 0 : index
      %c0_12 = arith.constant 0 : index
      %13 = vector.load %arg3[%c0_11, %c0_12] : memref<4x1024xbf16, #tpu.memory_space<vmem>>, vector<4x1024xbf16>
      %cst_13 = arith.constant dense<0.000000e+00> : vector<2x1024xf32>
      %14 = tpu.matmul %12, %13, %cst_13 {dimension_numbers = #tpu.dot_dimension_numbers<[1], [0], [0], [1], [0, 0, 1, 1], [], []>} : vector<2x4xbf16>, vector<4x1024xbf16>, vector<2x1024xf32> -> vector<2x1024xf32>
      %c0_14 = arith.constant 0 : index
      %c0_15 = arith.constant 0 : index
      %15 = vector.load %arg4[%c0_14, %c0_15] : memref<1x1024xf32, #tpu.memory_space<vmem>>, vector<1x1024xf32>
      %16 = vector.broadcast %15 : vector<1x1024xf32> to vector<2x1024xf32>
      %17 = arith.addf %14, %16 : vector<2x1024xf32>
      %c0_16 = arith.constant 0 : index
      %c0_17 = arith.constant 0 : index
      %18 = vector.load %arg5[%c0_16, %c0_17] : memref<2x1024xf32, #tpu.memory_space<vmem>>, vector<2x1024xf32>
      tpu.vector_store %arg5[%c0_16, %c0_17], %17 {strides = array<i32>} : memref<2x1024xf32, #tpu.memory_space<vmem>>, vector<2x1024xf32>,
    } else {
    }
    return
  }
  func.func @transform_0(%arg0: i32, %arg1: i32) -> (i32, i32, i32) {
    %c0_i32 = arith.constant 0 : i32
    %c0_i32_0 = arith.constant 0 : i32
    return %arg0, %c0_i32, %arg1 : i32, i32, i32
  }
  func.func @transform_1(%arg0: i32, %arg1: i32) -> (i32, i32) {
    %c0_i32 = arith.constant 0 : i32
    %c0_i32_0 = arith.constant 0 : i32
    %c0_i32_1 = arith.constant 0 : i32
    return %c0_i32, %c0_i32_0 : i32, i32
  }
  func.func @transform_2(%arg0: i32, %arg1: i32) -> (i32, i32) {
    %c0_i32 = arith.constant 0 : i32
    %c0_i32_0 = arith.constant 0 : i32
    %c0_i32_1 = arith.constant 0 : i32
    return %c0_i32, %c0_i32_0 : i32, i32
  }
  func.func @transform_3(%arg0: i32, %arg1: i32) -> (i32, i32) {
    %c0_i32 = arith.constant 0 : i32
    %c0_i32_0 = arith.constant 0 : i32
    return %arg0, %c0_i32 : i32, i32
  }
}

</mosaic_0001>

<llo_original>
// kernel: tpu_custom_call.1
$region0: #{tpu_custom_call.1}
  #allocation0 [shape = 'u32[]', space=smem, size = 0x4, offset = 0x4, fixed_abs, tag = 'smem constant byte address 0x4 - core index']
  #allocation1 [shape = 'u32[144,128]{1,0:T(1,128)}', space=vmem, size = 0x12000, scoped, tag = 'internal scratch']
  #allocation2 [shape = 'f32[2,4]{1,0:T(2,128)}', space=vmem, size = 0x400, scoped, tag = 'scratch operand']
  %s0 = inlined_call_operand.hbm [shape: f32[2,4,256], index: 0, kind: input, shape index: {}]
  %s1 = inlined_call_operand.hbm [shape: bf16[4,1024], index: 1, kind: input, shape index: {}]
  %s2 = inlined_call_operand.hbm [shape: f32[1,1024], index: 2, kind: input, shape index: {}]
  %s3 = inlined_call_operand.hbm [shape: f32[2,1024], index: 3, kind: output, shape index: {}]
  %s4 = sld [smem:[#allocation0]]
  $region42: #{tpu_custom_call.1} parent=0
    _
  %s6 = ssub.s32 1, %s4
  %s7 = scalar_select 0, %s6, %s4
  $region1: #{tpu_custom_call.1} parent=0
    #allocation3 [shape = 'u8[8192]{0}', space=vmem, size = 0x2000, scoped, tag = 'input window, operand 0, single buffered']
    #allocation4 [shape = 's32[1]{0}', space=sflag, size = 0x4, scoped, tag = 'scoped memory for tpu_custom_call.1']
    #allocation5 [shape = 's32[1]{0}', space=sflag, size = 0x4, scoped, tag = 'scoped memory for tpu_custom_call.1']
    #allocation6 [shape = 'u8[8192]{0}', space=vmem, size = 0x2000, scoped, tag = 'input window, operand 1, single buffered']
    #allocation7 [shape = 's32[1]{0}', space=sflag, size = 0x4, scoped, tag = 'scoped memory for tpu_custom_call.1']
    #allocation8 [shape = 'u8[4096]{0}', space=vmem, size = 0x1000, scoped, tag = 'input window, operand 2, single buffered']
    #allocation9 [shape = 'u8[8192]{0}', space=vmem, size = 0x2000, scoped, tag = 'output window, operand 0, single buffered']
    %8 = vsyncpa [#allocation4], 0
    %9 = vsyncpa [#allocation7], 0
    %10 = vsyncpa [#allocation5], 0
    // Predicated region
    $region2: #{tpu_custom_call.1} parent=1 // pred_check
      _
    $region3: #{tpu_custom_call.1} parent=1 // pred_check_branch
      %12 = sbr.rel (0) target = $region5
    $region4: #{tpu_custom_call.1} parent=1 // pred_region
      %s14 = ssub.s32 256, 256
      %15 = vsyncadd [#allocation4], %s14
      %s16 = sshll.u32 [#allocation3], 4
      %s17 = int_to_ptr.vmem [resolvable:$true] %s16
      %22 = dma.hbm_to_vmem [thread:$0]  %s0, 256, %s17, [#allocation4], 128, 128, 8
    $region5: #{tpu_custom_call.1} parent=1 // pred_fallthru
      _
    // Predicated region
    $region6: #{tpu_custom_call.1} parent=1 // pred_check
      _
    $region7: #{tpu_custom_call.1} parent=1 // pred_check_branch
      %24 = sbr.rel (0) target = $region9
    $region8: #{tpu_custom_call.1} parent=1 // pred_region
      %s26 = ssub.s32 256, 256
      %27 = vsyncadd [#allocation7], %s26
      %s29 = sshll.u32 [#allocation6], 4
      %s30 = int_to_ptr.vmem [resolvable:$true] %s29
      %32 = dma.hbm_to_vmem [thread:$0]  %s1, 256, %s30, [#allocation7]
    $region9: #{tpu_custom_call.1} parent=1 // pred_fallthru
      _
    // Predicated region
    $region10: #{tpu_custom_call.1} parent=1 // pred_check
      _
    $region11: #{tpu_custom_call.1} parent=1 // pred_check_branch
      %34 = sbr.rel (0) target = $region13
    $region12: #{tpu_custom_call.1} parent=1 // pred_region
      %s36 = ssub.s32 128, 128
      %37 = vsyncadd [#allocation7], %s36
      %s39 = sshll.u32 [#allocation8], 4
      %s40 = int_to_ptr.vmem [resolvable:$true] %s39
      %42 = dma.hbm_to_vmem [thread:$0]  %s2, 128, %s40, [#allocation7]
    $region13: #{tpu_custom_call.1} parent=1 // pred_fallthru
      _
    // Predicated region
    $region14: #{tpu_custom_call.1} parent=1 // pred_check
      _
    $region15: #{tpu_custom_call.1} parent=1 // pred_check_branch
      %44 = sbr.rel (0) target = $region17
    $region16: #{tpu_custom_call.1} parent=1 // pred_region
      %45 = dma.done [#allocation4], 256
    $region17: #{tpu_custom_call.1} parent=1 // pred_fallthru
      _
    // Predicated region
    $region18: #{tpu_custom_call.1} parent=1 // pred_check
      _
    $region19: #{tpu_custom_call.1} parent=1 // pred_check_branch
      %47 = sbr.rel (0) target = $region21
    $region20: #{tpu_custom_call.1} parent=1 // pred_region
      %48 = dma.done [#allocation7], 256
    $region21: #{tpu_custom_call.1} parent=1 // pred_fallthru
      _
    // Predicated region
    $region22: #{tpu_custom_call.1} parent=1 // pred_check
      _
    $region23: #{tpu_custom_call.1} parent=1 // pred_check_branch
      %50 = sbr.rel (0) target = $region25
    $region24: #{tpu_custom_call.1} parent=1 // pred_region
      %51 = dma.done [#allocation7], 128
    $region25: #{tpu_custom_call.1} parent=1 // pred_fallthru
      _
    %p53 = scmp.eq.s32.totalorder 0, 0
    // Predicated region
    $region26: #{tpu_custom_call.1} parent=1 // pred_check
      %p54 = pneg %p53
    $region27: #{tpu_custom_call.1} parent=1 // pred_check_branch
      %56 = sbr.rel (%p54) target = $region29
    $region28: #{tpu_custom_call.1} parent=1 // pred_region
      %vm57 = vcmask 25600
      %58 = vst.msk [vmem:[#allocation2] sm:$0x3] %vm57, 0.0
    $region29: #{tpu_custom_call.1} parent=1 // pred_fallthru
      _
    %v59 = vld [vmem:[#allocation3] sm:$0xff]
    %v60 = vld [vmem:[#allocation3 + $0x8] sm:$0xff]
    %v61 = vld [vmem:[#allocation2] sm:$0x3]
    %v64 = vcombine.high %v59, %v59
    %v65 = vcombine.high %v60, %v60
    %vm68 = vcmask 1043456
    %v69 = vsel %vm68, %v59, 0.0
    %v70 = vsel %vm68, %v64, 0.0
    %v71 = vadd.f32 %v69, %v70
    %72 = vadd.xlane.f32.xlu0 %v71
    %v73 = vpop.xlane.xlu0 %72
    %v74 = vsel %vm68, %v60, 0.0
    %v75 = vsel %vm68, %v65, 0.0
    %v76 = vadd.f32 %v74, %v75
    %77 = vadd.xlane.f32.xlu0 %v76
    %v78 = vpop.xlane.xlu0 %77
    %v81 = vlaneseq
    %v82 = vand.u32 %v81, 127
    %v83 = vlaneseq
    %v84 = vshrl.u32 %v83, 7
    %v85 = vsub.s32 %v82, %v84
    %v86 = vrot.slane %v73, %v85
    %v87 = vlaneseq
    %v88 = vshrl.u32 %v87, 7
    %v89 = vsub.s32 %v82, %v88
    %v90 = vrot.slane %v78, %v89
    %vm91 = vcmask 1041409
    %v92 = vsel %vm91, %v90, %v86
    %v94 = vadd.f32 %v61, %v92
    %vm95 = vcmask 25600
    %96 = vst.msk [vmem:[#allocation2] sm:$0x3] %vm95, %v94
    // Predicated region
    $region30: #{tpu_custom_call.1} parent=1 // pred_check
      %p97 = pneg %p53
    $region31: #{tpu_custom_call.1} parent=1 // pred_check_branch
      %99 = sbr.rel (%p97) target = $region33
    $region32: #{tpu_custom_call.1} parent=1 // pred_region
      %v100 = vld [vmem:[#allocation2] sm:$0x3]
      %v101 = vpack.c.bf16 %v100, %v100
      %v102 = vld [vmem:[#allocation6] sm:$0xff]
      %v103 = vld [vmem:[#allocation6 + $0x8] sm:$0xff]
      %v104 = vld [vmem:[#allocation8] sm:$0xff]
      %v106 = vlaneseq
      %v107 = vshrl.u32 %v106, 7
      %v108 = vsub.s32 0, %v107
      %v109 = vrot.slane %v104, %v108
      %v110 = vlaneseq
      %v111 = vshrl.u32 %v110, 7
      %v112 = vsub.s32 1, %v111
      %v113 = vrot.slane %v104, %v112
      %v114 = vlaneseq
      %v115 = vshrl.u32 %v114, 7
      %v116 = vsub.s32 2, %v115
      %v117 = vrot.slane %v104, %v116
      %v118 = vlaneseq
      %v119 = vshrl.u32 %v118, 7
      %v120 = vsub.s32 3, %v119
      %v121 = vrot.slane %v104, %v120
      %v122 = vlaneseq
      %v123 = vshrl.u32 %v122, 7
      %v124 = vsub.s32 4, %v123
      %v125 = vrot.slane %v104, %v124
      %v126 = vlaneseq
      %v127 = vshrl.u32 %v126, 7
      %v128 = vsub.s32 5, %v127
      %v129 = vrot.slane %v104, %v128
      %v130 = vlaneseq
      %v131 = vshrl.u32 %v130, 7
      %v132 = vsub.s32 6, %v131
      %v133 = vrot.slane %v104, %v132
      %v134 = vlaneseq
      %v135 = vshrl.u32 %v134, 7
      %v136 = vsub.s32 7, %v135
      %v137 = vrot.slane %v104, %v136
      %v148 = vcombine.high %v102, %v102
      %v150 = vunpack.c.l.s4 1983009808
      %v151 = vunpack.c.0.s8 %v150
      %v152 = vlaneseq
      %v153 = vshrl.u32 %v152, 7
      %v154 = vsub.s32 %v151, %v153
      %v155 = vrot.slane %v102, %v154
      %v157 = vunpack.c.l.s4 1983009808
      %v158 = vunpack.c.0.s8 %v157
      %v159 = vlaneseq
      %v160 = vshrl.u32 %v159, 7
      %v161 = vsub.s32 %v158, %v160
      %v162 = vrot.slane %v148, %v161
      %v163 = vcombine.high %v155, %v155
      %v164 = vcombine.high %v162, %v162
      %v165 = vcombine.high %v103, %v103
      %v167 = vunpack.c.l.s4 1983009808
      %v168 = vunpack.c.0.s8 %v167
      %v169 = vlaneseq
      %v170 = vshrl.u32 %v169, 7
      %v171 = vsub.s32 %v168, %v170
      %v172 = vrot.slane %v103, %v171
      %v174 = vunpack.c.l.s4 1983009808
      %v175 = vunpack.c.0.s8 %v174
      %v176 = vlaneseq
      %v177 = vshrl.u32 %v176, 7
      %v178 = vsub.s32 %v175, %v177
      %v179 = vrot.slane %v165, %v178
      %v180 = vcombine.high %v172, %v172
      %v181 = vcombine.high %v179, %v179
      %vm182 = vcmask 31744
      %v184 = vsel %vm182, %v101, 0
      %vm186 = vcmask 1041408
      %v188 = vsel %vm186, %v155, 0
      %v191 = vsel %vm186, %v163, 0
      %v194 = vsel %vm186, %v162, 0
      %v197 = vsel %vm186, %v164, 0
      %v200 = vsel %vm186, %v172, 0
      %v203 = vsel %vm186, %v180, 0
      %v206 = vsel %vm186, %v179, 0
      %v209 = vsel %vm186, %v181, 0
      %211 = vmatprep.subr.bf16.mxu0 %v191
      %212 = vmatpush1.bf16.msra.mxu0 %v188
      %213 = vmatprep.subr.bf16.mxu0 0
      %214 = vmatpush1.bf16.msra.mxu0 0
      %215 = vmatprep.subr.bf16.mxu0 0
      %216 = vmatpush1.bf16.msra.mxu0 0
      %217 = vmatprep.subr.bf16.mxu0 0
      %218 = vmatpush1.bf16.msra.mxu0 0
      %219 = vmatprep.subr.bf16.mxu0 0
      %220 = vmatpush1.bf16.msra.mxu0 0
      %221 = vmatprep.subr.bf16.mxu0 0
      %222 = vmatpush1.bf16.msra.mxu0 0
      %223 = vmatprep.subr.bf16.mxu0 0
      %224 = vmatpush1.bf16.msra.mxu0 0
      %225 = vmatprep.subr.bf16.mxu0 0
      %226 = vmatpush1.bf16.msra.mxu0 0
      %227 = vmatprep.subr.bf16.mxu0 0
      %228 = vmatpush1.bf16.msra.mxu0 0
      %229 = vmatprep.subr.bf16.mxu0 0
      %230 = vmatpush1.bf16.msra.mxu0 0
      %231 = vmatprep.subr.bf16.mxu0 0
      %232 = vmatpush1.bf16.msra.mxu0 0
      %233 = vmatprep.subr.bf16.mxu0 0
      %234 = vmatpush1.bf16.msra.mxu0 0
      %235 = vmatprep.subr.bf16.mxu0 0
      %236 = vmatpush1.bf16.msra.mxu0 0
      %237 = vmatprep.subr.bf16.mxu0 0
      %238 = vmatpush1.bf16.msra.mxu0 0
      %239 = vmatprep.subr.bf16.mxu0 0
      %240 = vmatpush1.bf16.msra.mxu0 0
      %241 = vmatprep.subr.bf16.mxu0 0
      %242 = vmatpush1.bf16.msra.mxu0 0
      %243 = vmatprep.mubr.bf16.mxu0 0
      %244 = vmatmul.mubr.bf16.gmra.mrb[0].mxu0 %v184
      %v245 = vpop.f32.mrb[0].mxu0
      %v246 = vadd.f32 %v109, %v245
      %v247 = vpop.f32.mrb[0].mxu0
      %v248 = vadd.f32 %v113, %v247
      %v249 = vpop.f32.mrb[0].mxu0
      %v250 = vpop.f32.mrb[0].mxu0
      %251 = vdwg.mxu0
      %252 = vmatprep.subr.bf16.mxu0 %v197
      %253 = vmatpush1.bf16.msra.mxu0 %v194
      %254 = vmatprep.subr.bf16.mxu0 0
      %255 = vmatpush1.bf16.msra.mxu0 0
      %256 = vmatprep.subr.bf16.mxu0 0
      %257 = vmatpush1.bf16.msra.mxu0 0
      %258 = vmatprep.subr.bf16.mxu0 0
      %259 = vmatpush1.bf16.msra.mxu0 0
      %260 = vmatprep.subr.bf16.mxu0 0
      %261 = vmatpush1.bf16.msra.mxu0 0
      %262 = vmatprep.subr.bf16.mxu0 0
      %263 = vmatpush1.bf16.msra.mxu0 0
      %264 = vmatprep.subr.bf16.mxu0 0
      %265 = vmatpush1.bf16.msra.mxu0 0
      %266 = vmatprep.subr.bf16.mxu0 0
      %267 = vmatpush1.bf16.msra.mxu0 0
      %268 = vmatprep.subr.bf16.mxu0 0
      %269 = vmatpush1.bf16.msra.mxu0 0
      %270 = vmatprep.subr.bf16.mxu0 0
      %271 = vmatpush1.bf16.msra.mxu0 0
      %272 = vmatprep.subr.bf16.mxu0 0
      %273 = vmatpush1.bf16.msra.mxu0 0
      %274 = vmatprep.subr.bf16.mxu0 0
      %275 = vmatpush1.bf16.msra.mxu0 0
      %276 = vmatprep.subr.bf16.mxu0 0
      %277 = vmatpush1.bf16.msra.mxu0 0
      %278 = vmatprep.subr.bf16.mxu0 0
      %279 = vmatpush1.bf16.msra.mxu0 0
      %280 = vmatprep.subr.bf16.mxu0 0
      %281 = vmatpush1.bf16.msra.mxu0 0
      %282 = vmatprep.subr.bf16.mxu0 0
      %283 = vmatpush1.bf16.msra.mxu0 0
      %284 = vmatprep.mubr.bf16.mxu0 0
      %285 = vmatmul.mubr.bf16.gmra.mrb[0].mxu0 %v184
      %v286 = vpop.f32.mrb[0].mxu0
      %v287 = vadd.f32 %v117, %v286
      %v288 = vpop.f32.mrb[0].mxu0
      %v289 = vadd.f32 %v121, %v288
      %v290 = vpop.f32.mrb[0].mxu0
      %v291 = vpop.f32.mrb[0].mxu0
      %292 = vdwg.mxu0
      %293 = vmatprep.subr.bf16.mxu0 %v203
      %294 = vmatpush1.bf16.msra.mxu0 %v200
      %295 = vmatprep.subr.bf16.mxu0 0
      %296 = vmatpush1.bf16.msra.mxu0 0
      %297 = vmatprep.subr.bf16.mxu0 0
      %298 = vmatpush1.bf16.msra.mxu0 0
      %299 = vmatprep.subr.bf16.mxu0 0
      %300 = vmatpush1.bf16.msra.mxu0 0
      %301 = vmatprep.subr.bf16.mxu0 0
      %302 = vmatpush1.bf16.msra.mxu0 0
      %303 = vmatprep.subr.bf16.mxu0 0
      %304 = vmatpush1.bf16.msra.mxu0 0
      %305 = vmatprep.subr.bf16.mxu0 0
      %306 = vmatpush1.bf16.msra.mxu0 0
      %307 = vmatprep.subr.bf16.mxu0 0
      %308 = vmatpush1.bf16.msra.mxu0 0
      %309 = vmatprep.subr.bf16.mxu0 0
      %310 = vmatpush1.bf16.msra.mxu0 0
      %311 = vmatprep.subr.bf16.mxu0 0
      %312 = vmatpush1.bf16.msra.mxu0 0
      %313 = vmatprep.subr.bf16.mxu0 0
      %314 = vmatpush1.bf16.msra.mxu0 0
      %315 = vmatprep.subr.bf16.mxu0 0
      %316 = vmatpush1.bf16.msra.mxu0 0
      %317 = vmatprep.subr.bf16.mxu0 0
      %318 = vmatpush1.bf16.msra.mxu0 0
      %319 = vmatprep.subr.bf16.mxu0 0
      %320 = vmatpush1.bf16.msra.mxu0 0
      %321 = vmatprep.subr.bf16.mxu0 0
      %322 = vmatpush1.bf16.msra.mxu0 0
      %323 = vmatprep.subr.bf16.mxu0 0
      %324 = vmatpush1.bf16.msra.mxu0 0
      %325 = vmatprep.mubr.bf16.mxu0 0
      %326 = vmatmul.mubr.bf16.gmra.mrb[0].mxu0 %v184
      %v327 = vpop.f32.mrb[0].mxu0
      %v328 = vadd.f32 %v125, %v327
      %v329 = vpop.f32.mrb[0].mxu0
      %v330 = vadd.f32 %v129, %v329
      %v331 = vpop.f32.mrb[0].mxu0
      %v332 = vpop.f32.mrb[0].mxu0
      %333 = vdwg.mxu0
      %334 = vmatprep.subr.bf16.mxu0 %v209
      %335 = vmatpush1.bf16.msra.mxu0 %v206
      %336 = vmatprep.subr.bf16.mxu0 0
      %337 = vmatpush1.bf16.msra.mxu0 0
      %338 = vmatprep.subr.bf16.mxu0 0
      %339 = vmatpush1.bf16.msra.mxu0 0
      %340 = vmatprep.subr.bf16.mxu0 0
      %341 = vmatpush1.bf16.msra.mxu0 0
      %342 = vmatprep.subr.bf16.mxu0 0
      %343 = vmatpush1.bf16.msra.mxu0 0
      %344 = vmatprep.subr.bf16.mxu0 0
      %345 = vmatpush1.bf16.msra.mxu0 0
      %346 = vmatprep.subr.bf16.mxu0 0
      %347 = vmatpush1.bf16.msra.mxu0 0
      %348 = vmatprep.subr.bf16.mxu0 0
      %349 = vmatpush1.bf16.msra.mxu0 0
      %350 = vmatprep.subr.bf16.mxu0 0
      %351 = vmatpush1.bf16.msra.mxu0 0
      %352 = vmatprep.subr.bf16.mxu0 0
      %353 = vmatpush1.bf16.msra.mxu0 0
      %354 = vmatprep.subr.bf16.mxu0 0
      %355 = vmatpush1.bf16.msra.mxu0 0
      %356 = vmatprep.subr.bf16.mxu0 0
      %357 = vmatpush1.bf16.msra.mxu0 0
      %358 = vmatprep.subr.bf16.mxu0 0
      %359 = vmatpush1.bf16.msra.mxu0 0
      %360 = vmatprep.subr.bf16.mxu0 0
      %361 = vmatpush1.bf16.msra.mxu0 0
      %362 = vmatprep.subr.bf16.mxu0 0
      %363 = vmatpush1.bf16.msra.mxu0 0
      %364 = vmatprep.subr.bf16.mxu0 0
      %365 = vmatpush1.bf16.msra.mxu0 0
      %366 = vmatprep.mubr.bf16.mxu0 0
      %367 = vmatmul.mubr.bf16.gmra.mrb[0].mxu0 %v184
      %v368 = vpop.f32.mrb[0].mxu0
      %v369 = vadd.f32 %v133, %v368
      %v370 = vpop.f32.mrb[0].mxu0
      %v371 = vadd.f32 %v137, %v370
      %v372 = vpop.f32.mrb[0].mxu0
      %v373 = vpop.f32.mrb[0].mxu0
      %374 = vdwg.mxu0
      %v383 = vcombine.low %v246, %v248
      %v384 = vcombine.low %v287, %v289
      %v386 = vunpack.c.l.s4 1983009808
      %v387 = vunpack.c.0.s8 %v386
      %v388 = vlaneseq
      %v389 = vshrl.u32 %v388, 7
      %v390 = vsub.s32 %v387, %v389
      %v391 = vrot.slane %v383, %v390
      %v393 = vunpack.c.l.s4 1983009808
      %v394 = vunpack.c.0.s8 %v393
      %v395 = vlaneseq
      %v396 = vshrl.u32 %v395, 7
      %v397 = vsub.s32 %v394, %v396
      %v398 = vrot.slane %v384, %v397
      %v399 = vcombine.low %v391, %v398
      %v400 = vcombine.low %v328, %v330
      %v401 = vcombine.low %v369, %v371
      %v403 = vunpack.c.l.s4 1983009808
      %v404 = vunpack.c.0.s8 %v403
      %v405 = vlaneseq
      %v406 = vshrl.u32 %v405, 7
      %v407 = vsub.s32 %v404, %v406
      %v408 = vrot.slane %v400, %v407
      %v410 = vunpack.c.l.s4 1983009808
      %v411 = vunpack.c.0.s8 %v410
      %v412 = vlaneseq
      %v413 = vshrl.u32 %v412, 7
      %v414 = vsub.s32 %v411, %v413
      %v415 = vrot.slane %v401, %v414
      %v416 = vcombine.low %v408, %v415
      %419 = vst [vmem:[#allocation9] sm:$0xff] %v399
      %420 = vst [vmem:[#allocation9 + $0x8] sm:$0xff] %v416
    $region33: #{tpu_custom_call.1} parent=1 // pred_fallthru
      _
    // Predicated region
    $region34: #{tpu_custom_call.1} parent=1 // pred_check
      _
    $region35: #{tpu_custom_call.1} parent=1 // pred_check_branch
      %422 = sbr.rel (0) target = $region37
    $region36: #{tpu_custom_call.1} parent=1 // pred_region
      %s424 = ssub.s32 256, 256
      %425 = vsyncadd [#allocation5], %s424
      %s427 = sshll.u32 [#allocation9], 4
      %s428 = int_to_ptr.vmem [resolvable:$true] %s427
      %430 = dma.vmem_to_hbm [thread:$0]  %s428, 256, %s3, [#allocation5]
    $region37: #{tpu_custom_call.1} parent=1 // pred_fallthru
      _
    // Predicated region
    $region38: #{tpu_custom_call.1} parent=1 // pred_check
      _
    $region39: #{tpu_custom_call.1} parent=1 // pred_check_branch
      %432 = sbr.rel (0) target = $region41
    $region40: #{tpu_custom_call.1} parent=1 // pred_region
      %433 = dma.done [#allocation5], 256
    $region41: #{tpu_custom_call.1} parent=1 // pred_fallthru
      _
    %434 = vsyncpa [#allocation4], 1
    %435 = vsyncpa [#allocation7], 1
    %436 = vsyncpa [#allocation5], 1

</llo_original>
